<compile_context>
chip_gen: v5e
topology: v5e:2x2
jax: 0.10.0
libtpu: 0.0.40
codegen_flags: <defaults>
</compile_context>

<pallas_src>
import jax
import jax.numpy as jnp
from jax.experimental import pallas as pl
from jax.experimental.pallas import tpu as pltpu


def _meta_learner_kernel(xT_ref, w1_ref, w2_ref, w3_ref, w45_ref, b_ref, o_ref):
    """Transposed fused MLP: every activation is (features, batch_tile) so the
    batch axis sits on the 128-wide lane dimension."""
    cdt = w1_ref.dtype                       # MXU operand dtype (bf16 or f32)
    h1 = w1_ref.shape[0]
    h2 = w2_ref.shape[0]
    h3 = w3_ref.shape[0]
    out_pad = w45_ref.shape[0] // 2          # sublane-aligned split point
    out_dim = o_ref.shape[0]

    x = xT_ref[...]                          # (input_dim, batch_tile)

    # Hidden 1: Linear + ReLU (Dropout is identity at inference).
    h = jnp.dot(w1_ref[...], x, preferred_element_type=jnp.float32)
    h = jnp.maximum(h + b_ref[pl.ds(0, h1), :], 0.0).astype(cdt)

    # Hidden 2: Linear + ReLU.
    h = jnp.dot(w2_ref[...], h, preferred_element_type=jnp.float32)
    h = jnp.maximum(h + b_ref[pl.ds(h1, h2), :], 0.0).astype(cdt)

    # Hidden 3: Linear + ReLU.
    h = jnp.dot(w3_ref[...], h, preferred_element_type=jnp.float32)
    h = jnp.maximum(h + b_ref[pl.ds(h1 + h2, h3), :], 0.0).astype(cdt)

    # Fused output projection + constraint pre-activation:
    #   z[:out_pad]  = W4 @ h + b4                (rows >= out_dim are zero pad)
    #   z[out_pad:]  = (Wc@W4) @ h + (Wc@b4 + bc) (pre-sigmoid constraint)
    z = jnp.dot(w45_ref[...], h, preferred_element_type=jnp.float32)
    z = z + b_ref[pl.ds(h1 + h2 + h3, 2 * out_pad), :]

    out = z[0:out_dim, :]                                   # aligned prefix
    c = jax.nn.sigmoid(z[out_pad:out_pad + out_dim, :])     # vreg-aligned start
    o_ref[...] = (out * c).astype(o_ref.dtype)               # lane-dense store


def _num_tensorcores_per_chip():
    try:
        kind = jax.devices()[0].device_kind.lower()
    except Exception:
        return 1
    return 2 if ("v7" in kind or "tpu7" in kind) else 1


def _pick_batch_tile(batch, num_cores):
    """Batch lives on lanes, so tiles must be a multiple of 128 (or the whole
    batch).  Single-TC chips (v5e/v6e): one big tile, since ~0.35us/grid-step
    overhead exceeds this MLP's per-tile compute.  v7x (2 TCs): prefer an even
    number of tiles so the 'parallel' batch axis load-balances both cores."""
    if batch % 128 != 0 or batch <= 128:
        # TODO(synk): pad ragged batches up to a multiple of 128 instead of
        # falling back to one full-batch tile (disables the v7x 2-core split).
        return batch
    if num_cores <= 1:
        if batch <= 4096:
            return batch
        for t in (4096, 2048, 1024, 512, 256, 128):
            if batch % t == 0:
                return t
        return batch
    for t in (4096, 2048, 1024, 512, 256, 128):
        if batch % t == 0 and (batch // t) % 2 == 0:
            return t
    return batch


def prepare_params(params, *, compute_dtype=jnp.bfloat16):
    """One-time weight preprocessing (fusion + casts + bias packing).

    Call once and reuse the result for every meta_learner_forward call; doing
    this per call would rival the microsecond-scale kernel itself.
    Expects torch-layout params: w* are (out_dim, in_dim), b* are (out_dim,).
    """
    f32 = jnp.float32
    w1, b1 = jnp.asarray(params["w1"], f32), jnp.asarray(params["b1"], f32)
    w2, b2 = jnp.asarray(params["w2"], f32), jnp.asarray(params["b2"], f32)
    w3, b3 = jnp.asarray(params["w3"], f32), jnp.asarray(params["b3"], f32)
    w4, b4 = jnp.asarray(params["w4"], f32), jnp.asarray(params["b4"], f32)
    wc, bc = jnp.asarray(params["wc"], f32), jnp.asarray(params["bc"], f32)

    output_dim = int(w4.shape[0])
    out_pad = ((output_dim + 7) // 8) * 8    # keep the in-kernel split aligned

    def pad_rows(a, rows):
        return jnp.pad(a, ((0, rows - a.shape[0]), (0, 0)))

    # Algebraic fusion (exact in f32): compose the constraint layer with the
    # output projection so the kernel needs a single final matmul.
    w45 = jnp.concatenate(
        [pad_rows(w4, out_pad), pad_rows(wc @ w4, out_pad)], axis=0)
    b45 = jnp.concatenate(
        [pad_rows(b4.reshape(-1, 1), out_pad),
         pad_rows(wc @ b4.reshape(-1, 1) + bc.reshape(-1, 1), out_pad)], axis=0)

    # Single packed bias block: [b1 ; b2 ; b3 ; b45], shape (sum_dout, 1).
    bias = jnp.concatenate(
        [b1.reshape(-1, 1), b2.reshape(-1, 1), b3.reshape(-1, 1), b45], axis=0)

    cdt = compute_dtype
    return {
        "w1": w1.astype(cdt), "w2": w2.astype(cdt), "w3": w3.astype(cdt),
        "w45": w45.astype(cdt), "bias": bias.astype(f32),
        "output_dim": output_dim,            # static metadata (python int)
    }


def meta_learner_forward(x, prepared, *, apply_constraints=True,
                         batch_tile=None):
    """Run the fused MetaLearner MLP. x: (batch, input_dim) f32 ->
    (batch, output_dim) f32."""
    # TODO(synk): apply_constraints=False would be a separate (cheaper) kernel
    # without the constraint gate; only the module-default fused path is here.
    assert apply_constraints, "only the default apply_constraints=True path is fused"

    w1, w2, w3, w45, bias = (prepared["w1"], prepared["w2"], prepared["w3"],
                             prepared["w45"], prepared["bias"])
    output_dim = int(prepared["output_dim"])
    cdt = w1.dtype

    batch, input_dim = x.shape
    assert input_dim == w1.shape[1]

    if batch_tile is None:
        batch_tile = _pick_batch_tile(batch, _num_tensorcores_per_chip())
    assert batch % batch_tile == 0
    assert batch_tile == batch or batch_tile % 128 == 0, \
        "batch_tile must be a multiple of 128 (lane width) or the full batch"

    # Lane-major input: batch on the 128-wide lane axis.
    xT = jnp.asarray(x, cdt).T                               # (input_dim, batch)

    h1, h2, h3 = w1.shape[0], w2.shape[0], w3.shape[0]
    out_pad = w45.shape[0] // 2

    w_args = (w1, w2, w3, w45, bias)
    weight_bytes = sum(int(a.size) * a.dtype.itemsize for a in w_args)
    cost = pl.CostEstimate(
        flops=2 * batch * (input_dim * h1 + h1 * h2 + h2 * h3
                           + h3 * 2 * out_pad),
        transcendentals=batch * output_dim,                  # sigmoid
        bytes_accessed=int(xT.size) * xT.dtype.itemsize
        + batch * output_dim * 4 + weight_bytes,
    )

    # Weights/biases are tiny: full-array blocks replicated across the batch
    # grid. Only x^T and the (transposed) output are tiled over batch (lanes).
    def full_spec(a):
        return pl.BlockSpec(a.shape, lambda i, n=a.ndim: (0,) * n)

    grid = (batch // batch_tile,)
    outT = pl.pallas_call(
        _meta_learner_kernel,
        out_shape=jax.ShapeDtypeStruct((output_dim, batch), jnp.float32),
        grid_spec=pltpu.PrefetchScalarGridSpec(
            num_scalar_prefetch=0,
            grid=grid,
            in_specs=[pl.BlockSpec((input_dim, batch_tile), lambda i: (0, i))]
            + [full_spec(a) for a in w_args],
            out_specs=pl.BlockSpec((output_dim, batch_tile), lambda i: (0, i)),
        ),
        compiler_params=pltpu.CompilerParams(
            dimension_semantics=("parallel",),
        ),
        cost_estimate=cost,
    )(xT, *w_args)
    return outT.T


def init_params(key, input_dim, hidden_layers, output_dim):
    """Deterministic PyTorch-style (uniform +-1/sqrt(fan_in)) init.

    Weights are stored in torch nn.Linear layout: (out_dim, in_dim); biases
    are (out_dim,)."""
    dims = [input_dim] + list(hidden_layers) + [output_dim]
    params = {}
    for name, (din, dout) in zip("1234", zip(dims[:-1], dims[1:])):
        key, kw, kb = jax.random.split(key, 3)
        bound = 1.0 / (din ** 0.5)
        params[f"w{name}"] = jax.random.uniform(
            kw, (dout, din), jnp.float32, -bound, bound)
        params[f"b{name}"] = jax.random.uniform(
            kb, (dout,), jnp.float32, -bound, bound)
    # physics_constraints: Linear(output_dim, output_dim) + Sigmoid
    key, kw, kb = jax.random.split(key, 3)
    bound = 1.0 / (output_dim ** 0.5)
    params["wc"] = jax.random.uniform(
        kw, (output_dim, output_dim), jnp.float32, -bound, bound)
    params["bc"] = jax.random.uniform(
        kb, (output_dim,), jnp.float32, -bound, bound)
    return params


def reference_forward(x, p):
    h = jnp.maximum(x @ p["w1"].T + p["b1"], 0.0)
    h = jnp.maximum(h @ p["w2"].T + p["b2"], 0.0)
    h = jnp.maximum(h @ p["w3"].T + p["b3"], 0.0)
    out = h @ p["w4"].T + p["b4"]
    c = jax.nn.sigmoid(out @ p["wc"].T + p["bc"])
    return out * c


if __name__ == "__main__":
    # Shapes consistent with the module: stacked base-model predictions,
    # e.g. 4 base models x 4 targets = 16 input features; default hidden stack.
    batch = 512
    input_dim = 16
    hidden_layers = [128, 64, 32]   # config default
    output_dim = 4

    key = jax.random.PRNGKey(0)
    key, kx = jax.random.split(key)
    x = jax.random.normal(kx, (batch, input_dim), jnp.float32)
    params = init_params(key, input_dim, hidden_layers, output_dim)

    ref = reference_forward(x, params)

    # Correctness check in f32 (exact semantics modulo the f32 reassociation
    # introduced by fusing the output projection with the constraint layer).
    prep_f32 = prepare_params(params, compute_dtype=jnp.float32)
    out_f32 = jax.block_until_ready(meta_learner_forward(x, prep_f32))
    assert out_f32.shape == (batch, output_dim)
    assert jnp.allclose(out_f32, ref, atol=1e-4, rtol=1e-4), "f32 mismatch vs reference"

    # Optimized path: bf16 MXU operands, f32 accumulation and activations.
    # Note: the fused W4@Wc weight is rounded to bf16 once, so this is not
    # bit-identical to evaluating the two layers separately in bf16.
    prep_bf16 = prepare_params(params)      # prepared ONCE, reused per call
    out_bf16 = jax.block_until_ready(meta_learner_forward(x, prep_bf16))
    assert out_bf16.shape == (batch, output_dim)
    assert jnp.allclose(out_bf16, ref, atol=5e-2, rtol=5e-2), "bf16 mismatch vs reference"

    print("KERNEL_OK")
</pallas_src>

<mosaic_0001>
module attributes {stable_mosaic.version = 11 : i64} {
  func.func @_meta_learner_kernel(%arg0: i32, %arg1: memref<16x512xf32, #tpu.memory_space<vmem>>, %arg2: memref<128x16xf32, #tpu.memory_space<vmem>>, %arg3: memref<64x128xf32, #tpu.memory_space<vmem>>, %arg4: memref<32x64xf32, #tpu.memory_space<vmem>>, %arg5: memref<16x32xf32, #tpu.memory_space<vmem>>, %arg6: memref<240x1xf32, #tpu.memory_space<vmem>>, %arg7: memref<4x512xf32, #tpu.memory_space<vmem>>) attributes {dimension_semantics = [#tpu.dimension_semantics<parallel>], iteration_bounds = array<i64: 1>, scalar_prefetch = 0 : i64, scratch_operands = 0 : i64, tpu.core_type = #tpu.core_type<tc>, window_params = [{transform_indices = @transform_0, window_bounds = array<i64: 16, 512>}, {pipeline_mode = #tpu.pipeline_mode<synchronous>, transform_indices = @transform_1, window_bounds = array<i64: 128, 16>}, {pipeline_mode = #tpu.pipeline_mode<synchronous>, transform_indices = @transform_2, window_bounds = array<i64: 64, 128>}, {pipeline_mode = #tpu.pipeline_mode<synchronous>, transform_indices = @transform_3, window_bounds = array<i64: 32, 64>}, {pipeline_mode = #tpu.pipeline_mode<synchronous>, transform_indices = @transform_4, window_bounds = array<i64: 16, 32>}, {pipeline_mode = #tpu.pipeline_mode<synchronous>, transform_indices = @transform_5, window_bounds = array<i64: 240, 1>}, {transform_indices = @transform_6, window_bounds = array<i64: 4, 512>}]} {
    %c0 = arith.constant 0 : index
    %c0_0 = arith.constant 0 : index
    %0 = vector.load %arg1[%c0, %c0_0] : memref<16x512xf32, #tpu.memory_space<vmem>>, vector<16x512xf32>
    %c0_1 = arith.constant 0 : index
    %c0_2 = arith.constant 0 : index
    %1 = vector.load %arg2[%c0_1, %c0_2] : memref<128x16xf32, #tpu.memory_space<vmem>>, vector<128x16xf32>
    %cst = arith.constant dense<0.000000e+00> : vector<128x512xf32>
    %2 = tpu.matmul %1, %0, %cst {dimension_numbers = #tpu.dot_dimension_numbers<[1], [0], [0], [1], [0, 0, 1, 1], [], []>} : vector<128x16xf32>, vector<16x512xf32>, vector<128x512xf32> -> vector<128x512xf32>
    %c0_3 = arith.constant 0 : index
    %c0_4 = arith.constant 0 : index
    %3 = vector.load %arg6[%c0_3, %c0_4] : memref<240x1xf32, #tpu.memory_space<vmem>>, vector<128x1xf32>
    %4 = vector.broadcast %3 : vector<128x1xf32> to vector<128x512xf32>
    %5 = arith.addf %2, %4 : vector<128x512xf32>
    %cst_5 = arith.constant 0.000000e+00 : f32
    %6 = vector.broadcast %cst_5 : f32 to vector<128x512xf32>
    %7 = arith.maximumf %5, %6 : vector<128x512xf32>
    %c0_6 = arith.constant 0 : index
    %c0_7 = arith.constant 0 : index
    %8 = vector.load %arg3[%c0_6, %c0_7] : memref<64x128xf32, #tpu.memory_space<vmem>>, vector<64x128xf32>
    %cst_8 = arith.constant dense<0.000000e+00> : vector<64x512xf32>
    %9 = tpu.matmul %8, %7, %cst_8 {dimension_numbers = #tpu.dot_dimension_numbers<[1], [0], [0], [1], [0, 0, 1, 1], [], []>} : vector<64x128xf32>, vector<128x512xf32>, vector<64x512xf32> -> vector<64x512xf32>
    %c128 = arith.constant 128 : index
    %c0_9 = arith.constant 0 : index
    %10 = vector.load %arg6[%c128, %c0_9] : memref<240x1xf32, #tpu.memory_space<vmem>>, vector<64x1xf32>
    %11 = vector.broadcast %10 : vector<64x1xf32> to vector<64x512xf32>
    %12 = arith.addf %9, %11 : vector<64x512xf32>
    %cst_10 = arith.constant 0.000000e+00 : f32
    %13 = vector.broadcast %cst_10 : f32 to vector<64x512xf32>
    %14 = arith.maximumf %12, %13 : vector<64x512xf32>
    %c0_11 = arith.constant 0 : index
    %c0_12 = arith.constant 0 : index
    %15 = vector.load %arg4[%c0_11, %c0_12] : memref<32x64xf32, #tpu.memory_space<vmem>>, vector<32x64xf32>
    %cst_13 = arith.constant dense<0.000000e+00> : vector<32x512xf32>
    %16 = tpu.matmul %15, %14, %cst_13 {dimension_numbers = #tpu.dot_dimension_numbers<[1], [0], [0], [1], [0, 0, 1, 1], [], []>} : vector<32x64xf32>, vector<64x512xf32>, vector<32x512xf32> -> vector<32x512xf32>
    %c192 = arith.constant 192 : index
    %c0_14 = arith.constant 0 : index
    %17 = vector.load %arg6[%c192, %c0_14] : memref<240x1xf32, #tpu.memory_space<vmem>>, vector<32x1xf32>
    %18 = vector.broadcast %17 : vector<32x1xf32> to vector<32x512xf32>
    %19 = arith.addf %16, %18 : vector<32x512xf32>
    %cst_15 = arith.constant 0.000000e+00 : f32
    %20 = vector.broadcast %cst_15 : f32 to vector<32x512xf32>
    %21 = arith.maximumf %19, %20 : vector<32x512xf32>
    %c0_16 = arith.constant 0 : index
    %c0_17 = arith.constant 0 : index
    %22 = vector.load %arg5[%c0_16, %c0_17] : memref<16x32xf32, #tpu.memory_space<vmem>>, vector<16x32xf32>
    %cst_18 = arith.constant dense<0.000000e+00> : vector<16x512xf32>
    %23 = tpu.matmul %22, %21, %cst_18 {dimension_numbers = #tpu.dot_dimension_numbers<[1], [0], [0], [1], [0, 0, 1, 1], [], []>} : vector<16x32xf32>, vector<32x512xf32>, vector<16x512xf32> -> vector<16x512xf32>
    %c224 = arith.constant 224 : index
    %c0_19 = arith.constant 0 : index
    %24 = vector.load %arg6[%c224, %c0_19] : memref<240x1xf32, #tpu.memory_space<vmem>>, vector<16x1xf32>
    %25 = vector.broadcast %24 : vector<16x1xf32> to vector<16x512xf32>
    %26 = arith.addf %23, %25 : vector<16x512xf32>
    %27 = vector.extract_strided_slice %26 {offsets = [0, 0], sizes = [4, 512], strides = [1, 1]} : vector<16x512xf32> to vector<4x512xf32>
    %28 = vector.extract_strided_slice %26 {offsets = [8, 0], sizes = [4, 512], strides = [1, 1]} : vector<16x512xf32> to vector<4x512xf32>
    %29 = arith.negf %28 : vector<4x512xf32>
    %30 = math.exp %29 : vector<4x512xf32>
    %cst_20 = arith.constant 1.000000e+00 : f32
    %31 = vector.broadcast %cst_20 : f32 to vector<4x512xf32>
    %32 = arith.addf %31, %30 : vector<4x512xf32>
    %33 = arith.divf %31, %32 : vector<4x512xf32>
    %34 = arith.mulf %27, %33 : vector<4x512xf32>
    %c0_21 = arith.constant 0 : index
    %c0_22 = arith.constant 0 : index
    %35 = vector.load %arg7[%c0_21, %c0_22] : memref<4x512xf32, #tpu.memory_space<vmem>>, vector<4x512xf32>
    tpu.vector_store %arg7[%c0_21, %c0_22], %34 {strides = array<i32>} : memref<4x512xf32, #tpu.memory_space<vmem>>, vector<4x512xf32>,
    return
  }
  func.func @transform_0(%arg0: i32) -> (i32, i32) {
    %c0_i32 = arith.constant 0 : i32
    %c0_i32_0 = arith.constant 0 : i32
    return %c0_i32, %arg0 : i32, i32
  }
  func.func @transform_1(%arg0: i32) -> (i32, i32) {
    %c0_i32 = arith.constant 0 : i32
    %c0_i32_0 = arith.constant 0 : i32
    %c0_i32_1 = arith.constant 0 : i32
    return %c0_i32, %c0_i32_0 : i32, i32
  }
  func.func @transform_2(%arg0: i32) -> (i32, i32) {
    %c0_i32 = arith.constant 0 : i32
    %c0_i32_0 = arith.constant 0 : i32
    %c0_i32_1 = arith.constant 0 : i32
    return %c0_i32, %c0_i32_0 : i32, i32
  }
  func.func @transform_3(%arg0: i32) -> (i32, i32) {
    %c0_i32 = arith.constant 0 : i32
    %c0_i32_0 = arith.constant 0 : i32
    %c0_i32_1 = arith.constant 0 : i32
    return %c0_i32, %c0_i32_0 : i32, i32
  }
  func.func @transform_4(%arg0: i32) -> (i32, i32) {
    %c0_i32 = arith.constant 0 : i32
    %c0_i32_0 = arith.constant 0 : i32
    %c0_i32_1 = arith.constant 0 : i32
    return %c0_i32, %c0_i32_0 : i32, i32
  }
  func.func @transform_5(%arg0: i32) -> (i32, i32) {
    %c0_i32 = arith.constant 0 : i32
    %c0_i32_0 = arith.constant 0 : i32
    %c0_i32_1 = arith.constant 0 : i32
    return %c0_i32, %c0_i32_0 : i32, i32
  }
  func.func @transform_6(%arg0: i32) -> (i32, i32) {
    %c0_i32 = arith.constant 0 : i32
    %c0_i32_0 = arith.constant 0 : i32
    return %c0_i32, %arg0 : i32, i32
  }
}

</mosaic_0001>

<llo_original>
// kernel: tpu_custom_call.1
$region0: #{tpu_custom_call.1}
  #allocation0 [shape = 'u32[]', space=smem, size = 0x4, offset = 0x4, fixed_abs, tag = 'smem constant byte address 0x4 - core index']
  #allocation1 [shape = 'u32[72,128]{1,0:T(1,128)}', space=vmem, size = 0x9000, scoped, tag = 'internal scratch']
  %s0 = inlined_call_operand.vmem [shape: f32[16,512], index: 0, kind: input, shape index: {}]
  %s1 = inlined_call_operand.vmem [shape: f32[128,16], index: 1, kind: input, shape index: {}]
  %s2 = inlined_call_operand.vmem [shape: f32[64,128], index: 2, kind: input, shape index: {}]
  %s3 = inlined_call_operand.vmem [shape: f32[32,64], index: 3, kind: input, shape index: {}]
  %s4 = inlined_call_operand.vmem [shape: f32[16,32], index: 4, kind: input, shape index: {}]
  %s5 = inlined_call_operand.vmem [shape: f32[240,1], index: 5, kind: input, shape index: {}]
  %s6 = inlined_call_operand.hbm [shape: f32[4,512], index: 6, kind: output, shape index: {}]
  %s7 = sld [smem:[#allocation0]]
  $region34: #{tpu_custom_call.1} parent=0
    _
  %s9 = ssub.s32 1, %s7
  %s10 = scalar_select 0, %s9, %s7
  $region1: #{tpu_custom_call.1} parent=0
    #allocation2 [shape = 'u8[8192]{0}', space=vmem, size = 0x2000, scoped, tag = 'output window, operand 0, single buffered']
    #allocation3 [shape = 's32[1]{0}', space=sflag, size = 0x4, scoped, tag = 'scoped memory for tpu_custom_call.1']
    %11 = vsyncpa [#allocation3], 0
    // Predicated region
    $region2: #{tpu_custom_call.1} parent=1 // pred_check
      _
    $region3: #{tpu_custom_call.1} parent=1 // pred_check_branch
      %13 = sbr.rel (0) target = $region5
    $region4: #{tpu_custom_call.1} parent=1 // pred_region
      _
    $region5: #{tpu_custom_call.1} parent=1 // pred_fallthru
      _
    // Predicated region
    $region6: #{tpu_custom_call.1} parent=1 // pred_check
      _
    $region7: #{tpu_custom_call.1} parent=1 // pred_check_branch
      %15 = sbr.rel (0) target = $region9
    $region8: #{tpu_custom_call.1} parent=1 // pred_region
      _
    $region9: #{tpu_custom_call.1} parent=1 // pred_fallthru
      _
    // Predicated region
    $region10: #{tpu_custom_call.1} parent=1 // pred_check
      _
    $region11: #{tpu_custom_call.1} parent=1 // pred_check_branch
      %17 = sbr.rel (0) target = $region13
    $region12: #{tpu_custom_call.1} parent=1 // pred_region
      _
    $region13: #{tpu_custom_call.1} parent=1 // pred_fallthru
      _
    // Predicated region
    $region14: #{tpu_custom_call.1} parent=1 // pred_check
      _
    $region15: #{tpu_custom_call.1} parent=1 // pred_check_branch
      %19 = sbr.rel (0) target = $region17
    $region16: #{tpu_custom_call.1} parent=1 // pred_region
      _
    $region17: #{tpu_custom_call.1} parent=1 // pred_fallthru
      _
    // Predicated region
    $region18: #{tpu_custom_call.1} parent=1 // pred_check
      _
    $region19: #{tpu_custom_call.1} parent=1 // pred_check_branch
      %21 = sbr.rel (0) target = $region21
    $region20: #{tpu_custom_call.1} parent=1 // pred_region
      _
    $region21: #{tpu_custom_call.1} parent=1 // pred_fallthru
      _
    // Predicated region
    $region22: #{tpu_custom_call.1} parent=1 // pred_check
      _
    $region23: #{tpu_custom_call.1} parent=1 // pred_check_branch
      %23 = sbr.rel (0) target = $region25
    $region24: #{tpu_custom_call.1} parent=1 // pred_region
      _
    $region25: #{tpu_custom_call.1} parent=1 // pred_fallthru
      _
    %v24 = vld [vmem:[%s0] sm:$0xff]
    %v25 = vld [vmem:[%s0 + $0x8] sm:$0xff]
    %v26 = vld [vmem:[%s0 + $0x10] sm:$0xff]
    %v27 = vld [vmem:[%s0 + $0x18] sm:$0xff]
    %v28 = vld [vmem:[%s0 + $0x20] sm:$0xff]
    %v29 = vld [vmem:[%s0 + $0x28] sm:$0xff]
    %v30 = vld [vmem:[%s0 + $0x30] sm:$0xff]
    %v31 = vld [vmem:[%s0 + $0x38] sm:$0xff]
    %v32 = vld [vmem:[%s1] sm:$0xff]
    %v33 = vld [vmem:[%s1 + $0x8] sm:$0xff]
    %v34 = vld [vmem:[%s1 + $0x10] sm:$0xff]
    %v35 = vld [vmem:[%s1 + $0x18] sm:$0xff]
    %v36 = vld [vmem:[%s1 + $0x20] sm:$0xff]
    %v37 = vld [vmem:[%s1 + $0x28] sm:$0xff]
    %v38 = vld [vmem:[%s1 + $0x30] sm:$0xff]
    %v39 = vld [vmem:[%s1 + $0x38] sm:$0xff]
    %v40 = vld [vmem:[%s1 + $0x40] sm:$0xff]
    %v41 = vld [vmem:[%s1 + $0x48] sm:$0xff]
    %v42 = vld [vmem:[%s1 + $0x50] sm:$0xff]
    %v43 = vld [vmem:[%s1 + $0x58] sm:$0xff]
    %v44 = vld [vmem:[%s1 + $0x60] sm:$0xff]
    %v45 = vld [vmem:[%s1 + $0x68] sm:$0xff]
    %v46 = vld [vmem:[%s1 + $0x70] sm:$0xff]
    %v47 = vld [vmem:[%s1 + $0x78] sm:$0xff]
    %v48 = vld [vmem:[%s5] sm:$0xff]
    %v49 = vld [vmem:[%s5 + $0x8] sm:$0xff]
    %v50 = vld [vmem:[%s5 + $0x10] sm:$0xff]
    %v51 = vld [vmem:[%s5 + $0x18] sm:$0xff]
    %v52 = vld [vmem:[%s5 + $0x20] sm:$0xff]
    %v53 = vld [vmem:[%s5 + $0x28] sm:$0xff]
    %v54 = vld [vmem:[%s5 + $0x30] sm:$0xff]
    %v55 = vld [vmem:[%s5 + $0x38] sm:$0xff]
    %v56 = vld [vmem:[%s5 + $0x40] sm:$0xff]
    %v57 = vld [vmem:[%s5 + $0x48] sm:$0xff]
    %v58 = vld [vmem:[%s5 + $0x50] sm:$0xff]
    %v59 = vld [vmem:[%s5 + $0x58] sm:$0xff]
    %v60 = vld [vmem:[%s5 + $0x60] sm:$0xff]
    %v61 = vld [vmem:[%s5 + $0x68] sm:$0xff]
    %v62 = vld [vmem:[%s5 + $0x70] sm:$0xff]
    %v63 = vld [vmem:[%s5 + $0x78] sm:$0xff]
    %65 = vset.pattern.permute.xlu0 0
    %66 = vperm.xlu0 %65, %v48
    %v67 = vpop.permute.xlu0 %66
    %70 = vset.pattern.permute.xlu0 0
    %71 = vperm.xlu0 %70, %v49
    %v72 = vpop.permute.xlu0 %71
    %75 = vset.pattern.permute.xlu0 0
    %76 = vperm.xlu0 %75, %v50
    %v77 = vpop.permute.xlu0 %76
    %80 = vset.pattern.permute.xlu0 0
    %81 = vperm.xlu0 %80, %v51
    %v82 = vpop.permute.xlu0 %81
    %85 = vset.pattern.permute.xlu0 0
    %86 = vperm.xlu0 %85, %v52
    %v87 = vpop.permute.xlu0 %86
    %90 = vset.pattern.permute.xlu0 0
    %91 = vperm.xlu0 %90, %v53
    %v92 = vpop.permute.xlu0 %91
    %95 = vset.pattern.permute.xlu0 0
    %96 = vperm.xlu0 %95, %v54
    %v97 = vpop.permute.xlu0 %96
    %100 = vset.pattern.permute.xlu0 0
    %101 = vperm.xlu0 %100, %v55
    %v102 = vpop.permute.xlu0 %101
    %105 = vset.pattern.permute.xlu0 0
    %106 = vperm.xlu0 %105, %v56
    %v107 = vpop.permute.xlu0 %106
    %110 = vset.pattern.permute.xlu0 0
    %111 = vperm.xlu0 %110, %v57
    %v112 = vpop.permute.xlu0 %111
    %115 = vset.pattern.permute.xlu0 0
    %116 = vperm.xlu0 %115, %v58
    %v117 = vpop.permute.xlu0 %116
    %120 = vset.pattern.permute.xlu0 0
    %121 = vperm.xlu0 %120, %v59
    %v122 = vpop.permute.xlu0 %121
    %125 = vset.pattern.permute.xlu0 0
    %126 = vperm.xlu0 %125, %v60
    %v127 = vpop.permute.xlu0 %126
    %130 = vset.pattern.permute.xlu0 0
    %131 = vperm.xlu0 %130, %v61
    %v132 = vpop.permute.xlu0 %131
    %135 = vset.pattern.permute.xlu0 0
    %136 = vperm.xlu0 %135, %v62
    %v137 = vpop.permute.xlu0 %136
    %140 = vset.pattern.permute.xlu0 0
    %141 = vperm.xlu0 %140, %v63
    %v142 = vpop.permute.xlu0 %141
    %vm144 = vcmask 130048
    %v146 = vsel %vm144, %v32, 0
    %v149 = vsel %vm144, %v33, 0
    %v152 = vsel %vm144, %v34, 0
    %v155 = vsel %vm144, %v35, 0
    %v158 = vsel %vm144, %v36, 0
    %v161 = vsel %vm144, %v37, 0
    %v164 = vsel %vm144, %v38, 0
    %v167 = vsel %vm144, %v39, 0
    %v170 = vsel %vm144, %v40, 0
    %v173 = vsel %vm144, %v41, 0
    %v176 = vsel %vm144, %v42, 0
    %v179 = vsel %vm144, %v43, 0
    %v182 = vsel %vm144, %v44, 0
    %v185 = vsel %vm144, %v45, 0
    %v188 = vsel %vm144, %v46, 0
    %v191 = vsel %vm144, %v47, 0
    %193 = vmatpush.msra.mxu0 0.0
    %194 = vmatpush.msra.mxu0 0.0
    %195 = vmatpush.msra.mxu0 0.0
    %196 = vmatpush.msra.mxu0 0.0
    %197 = vmatpush.msra.mxu0 0.0
    %198 = vmatpush.msra.mxu0 0.0
    %199 = vmatpush.msra.mxu0 0.0
    %200 = vmatpush.msra.mxu0 0.0
    %201 = vmatpush.msra.mxu0 0.0
    %202 = vmatpush.msra.mxu0 0.0
    %203 = vmatpush.msra.mxu0 0.0
    %204 = vmatpush.msra.mxu0 0.0
    %205 = vmatpush.msra.mxu0 0.0
    %206 = vmatpush.msra.mxu0 0.0
    %207 = vmatpush.msra.mxu0 %v28
    %208 = vmatpush.msra.mxu0 %v24
    %209 = vmatmul.f32.gmra.mxu0 %v146
    %v210 = vpop.f32.mrf.mxu0
    %v211 = vadd.f32 %v67, %v210
    %212 = vmatmul.f32.gmra.mxu0 %v149
    %v213 = vpop.f32.mrf.mxu0
    %v214 = vadd.f32 %v72, %v213
    %215 = vmatmul.f32.gmra.mxu0 %v152
    %v216 = vpop.f32.mrf.mxu0
    %v217 = vadd.f32 %v77, %v216
    %218 = vmatmul.f32.gmra.mxu0 %v155
    %v219 = vpop.f32.mrf.mxu0
    %v220 = vadd.f32 %v82, %v219
    %221 = vmatmul.f32.gmra.mxu0 %v158
    %v222 = vpop.f32.mrf.mxu0
    %v223 = vadd.f32 %v87, %v222
    %224 = vmatmul.f32.gmra.mxu0 %v161
    %v225 = vpop.f32.mrf.mxu0
    %v226 = vadd.f32 %v92, %v225
    %227 = vmatmul.f32.gmra.mxu0 %v164
    %v228 = vpop.f32.mrf.mxu0
    %v229 = vadd.f32 %v97, %v228
    %230 = vmatmul.f32.gmra.mxu0 %v167
    %v231 = vpop.f32.mrf.mxu0
    %v232 = vadd.f32 %v102, %v231
    %233 = vmatmul.f32.gmra.mxu0 %v170
    %v234 = vpop.f32.mrf.mxu0
    %v235 = vadd.f32 %v107, %v234
    %236 = vmatmul.f32.gmra.mxu0 %v173
    %v237 = vpop.f32.mrf.mxu0
    %v238 = vadd.f32 %v112, %v237
    %239 = vmatmul.f32.gmra.mxu0 %v176
    %v240 = vpop.f32.mrf.mxu0
    %v241 = vadd.f32 %v117, %v240
    %242 = vmatmul.f32.gmra.mxu0 %v179
    %v243 = vpop.f32.mrf.mxu0
    %v244 = vadd.f32 %v122, %v243
    %245 = vmatmul.f32.gmra.mxu0 %v182
    %v246 = vpop.f32.mrf.mxu0
    %v247 = vadd.f32 %v127, %v246
    %248 = vmatmul.f32.gmra.mxu0 %v185
    %v249 = vpop.f32.mrf.mxu0
    %v250 = vadd.f32 %v132, %v249
    %251 = vmatmul.f32.gmra.mxu0 %v188
    %v252 = vpop.f32.mrf.mxu0
    %v253 = vadd.f32 %v137, %v252
    %254 = vmatmul.f32.gmra.mxu0 %v191
    %v255 = vpop.f32.mrf.mxu0
    %v256 = vadd.f32 %v142, %v255
    %257 = vdwg.mxu0
    %258 = vmatpush.msra.mxu0 0.0
    %259 = vmatpush.msra.mxu0 0.0
    %260 = vmatpush.msra.mxu0 0.0
    %261 = vmatpush.msra.mxu0 0.0
    %262 = vmatpush.msra.mxu0 0.0
    %263 = vmatpush.msra.mxu0 0.0
    %264 = vmatpush.msra.mxu0 0.0
    %265 = vmatpush.msra.mxu0 0.0
    %266 = vmatpush.msra.mxu0 0.0
    %267 = vmatpush.msra.mxu0 0.0
    %268 = vmatpush.msra.mxu0 0.0
    %269 = vmatpush.msra.mxu0 0.0
    %270 = vmatpush.msra.mxu0 0.0
    %271 = vmatpush.msra.mxu0 0.0
    %272 = vmatpush.msra.mxu0 %v29
    %273 = vmatpush.msra.mxu0 %v25
    %274 = vmatmul.f32.gmra.mxu0 %v146
    %v275 = vpop.f32.mrf.mxu0
    %v276 = vadd.f32 %v67, %v275
    %277 = vmatmul.f32.gmra.mxu0 %v149
    %v278 = vpop.f32.mrf.mxu0
    %v279 = vadd.f32 %v72, %v278
    %280 = vmatmul.f32.gmra.mxu0 %v152
    %v281 = vpop.f32.mrf.mxu0
    %v282 = vadd.f32 %v77, %v281
    %283 = vmatmul.f32.gmra.mxu0 %v155
    %v284 = vpop.f32.mrf.mxu0
    %v285 = vadd.f32 %v82, %v284
    %286 = vmatmul.f32.gmra.mxu0 %v158
    %v287 = vpop.f32.mrf.mxu0
    %v288 = vadd.f32 %v87, %v287
    %289 = vmatmul.f32.gmra.mxu0 %v161
    %v290 = vpop.f32.mrf.mxu0
    %v291 = vadd.f32 %v92, %v290
    %292 = vmatmul.f32.gmra.mxu0 %v164
    %v293 = vpop.f32.mrf.mxu0
    %v294 = vadd.f32 %v97, %v293
    %295 = vmatmul.f32.gmra.mxu0 %v167
    %v296 = vpop.f32.mrf.mxu0
    %v297 = vadd.f32 %v102, %v296
    %298 = vmatmul.f32.gmra.mxu0 %v170
    %v299 = vpop.f32.mrf.mxu0
    %v300 = vadd.f32 %v107, %v299
    %301 = vmatmul.f32.gmra.mxu0 %v173
    %v302 = vpop.f32.mrf.mxu0
    %v303 = vadd.f32 %v112, %v302
    %304 = vmatmul.f32.gmra.mxu0 %v176
    %v305 = vpop.f32.mrf.mxu0
    %v306 = vadd.f32 %v117, %v305
    %307 = vmatmul.f32.gmra.mxu0 %v179
    %v308 = vpop.f32.mrf.mxu0
    %v309 = vadd.f32 %v122, %v308
    %310 = vmatmul.f32.gmra.mxu0 %v182
    %v311 = vpop.f32.mrf.mxu0
    %v312 = vadd.f32 %v127, %v311
    %313 = vmatmul.f32.gmra.mxu0 %v185
    %v314 = vpop.f32.mrf.mxu0
    %v315 = vadd.f32 %v132, %v314
    %316 = vmatmul.f32.gmra.mxu0 %v188
    %v317 = vpop.f32.mrf.mxu0
    %v318 = vadd.f32 %v137, %v317
    %319 = vmatmul.f32.gmra.mxu0 %v191
    %v320 = vpop.f32.mrf.mxu0
    %v321 = vadd.f32 %v142, %v320
    %322 = vdwg.mxu0
    %323 = vmatpush.msra.mxu0 0.0
    %324 = vmatpush.msra.mxu0 0.0
    %325 = vmatpush.msra.mxu0 0.0
    %326 = vmatpush.msra.mxu0 0.0
    %327 = vmatpush.msra.mxu0 0.0
    %328 = vmatpush.msra.mxu0 0.0
    %329 = vmatpush.msra.mxu0 0.0
    %330 = vmatpush.msra.mxu0 0.0
    %331 = vmatpush.msra.mxu0 0.0
    %332 = vmatpush.msra.mxu0 0.0
    %333 = vmatpush.msra.mxu0 0.0
    %334 = vmatpush.msra.mxu0 0.0
    %335 = vmatpush.msra.mxu0 0.0
    %336 = vmatpush.msra.mxu0 0.0
    %337 = vmatpush.msra.mxu0 %v30
    %338 = vmatpush.msra.mxu0 %v26
    %339 = vmatmul.f32.gmra.mxu0 %v146
    %v340 = vpop.f32.mrf.mxu0
    %v341 = vadd.f32 %v67, %v340
    %342 = vmatmul.f32.gmra.mxu0 %v149
    %v343 = vpop.f32.mrf.mxu0
    %v344 = vadd.f32 %v72, %v343
    %345 = vmatmul.f32.gmra.mxu0 %v152
    %v346 = vpop.f32.mrf.mxu0
    %v347 = vadd.f32 %v77, %v346
    %348 = vmatmul.f32.gmra.mxu0 %v155
    %v349 = vpop.f32.mrf.mxu0
    %v350 = vadd.f32 %v82, %v349
    %351 = vmatmul.f32.gmra.mxu0 %v158
    %v352 = vpop.f32.mrf.mxu0
    %v353 = vadd.f32 %v87, %v352
    %354 = vmatmul.f32.gmra.mxu0 %v161
    %v355 = vpop.f32.mrf.mxu0
    %v356 = vadd.f32 %v92, %v355
    %357 = vmatmul.f32.gmra.mxu0 %v164
    %v358 = vpop.f32.mrf.mxu0
    %v359 = vadd.f32 %v97, %v358
    %360 = vmatmul.f32.gmra.mxu0 %v167
    %v361 = vpop.f32.mrf.mxu0
    %v362 = vadd.f32 %v102, %v361
    %363 = vmatmul.f32.gmra.mxu0 %v170
    %v364 = vpop.f32.mrf.mxu0
    %v365 = vadd.f32 %v107, %v364
    %366 = vmatmul.f32.gmra.mxu0 %v173
    %v367 = vpop.f32.mrf.mxu0
    %v368 = vadd.f32 %v112, %v367
    %369 = vmatmul.f32.gmra.mxu0 %v176
    %v370 = vpop.f32.mrf.mxu0
    %v371 = vadd.f32 %v117, %v370
    %372 = vmatmul.f32.gmra.mxu0 %v179
    %v373 = vpop.f32.mrf.mxu0
    %v374 = vadd.f32 %v122, %v373
    %375 = vmatmul.f32.gmra.mxu0 %v182
    %v376 = vpop.f32.mrf.mxu0
    %v377 = vadd.f32 %v127, %v376
    %378 = vmatmul.f32.gmra.mxu0 %v185
    %v379 = vpop.f32.mrf.mxu0
    %v380 = vadd.f32 %v132, %v379
    %381 = vmatmul.f32.gmra.mxu0 %v188
    %v382 = vpop.f32.mrf.mxu0
    %v383 = vadd.f32 %v137, %v382
    %384 = vmatmul.f32.gmra.mxu0 %v191
    %v385 = vpop.f32.mrf.mxu0
    %v386 = vadd.f32 %v142, %v385
    %387 = vdwg.mxu0
    %388 = vmatpush.msra.mxu0 0.0
    %389 = vmatpush.msra.mxu0 0.0
    %390 = vmatpush.msra.mxu0 0.0
    %391 = vmatpush.msra.mxu0 0.0
    %392 = vmatpush.msra.mxu0 0.0
    %393 = vmatpush.msra.mxu0 0.0
    %394 = vmatpush.msra.mxu0 0.0
    %395 = vmatpush.msra.mxu0 0.0
    %396 = vmatpush.msra.mxu0 0.0
    %397 = vmatpush.msra.mxu0 0.0
    %398 = vmatpush.msra.mxu0 0.0
    %399 = vmatpush.msra.mxu0 0.0
    %400 = vmatpush.msra.mxu0 0.0
    %401 = vmatpush.msra.mxu0 0.0
    %402 = vmatpush.msra.mxu0 %v31
    %403 = vmatpush.msra.mxu0 %v27
    %404 = vmatmul.f32.gmra.mxu0 %v146
    %v405 = vpop.f32.mrf.mxu0
    %v406 = vadd.f32 %v67, %v405
    %407 = vmatmul.f32.gmra.mxu0 %v149
    %v408 = vpop.f32.mrf.mxu0
    %v409 = vadd.f32 %v72, %v408
    %410 = vmatmul.f32.gmra.mxu0 %v152
    %v411 = vpop.f32.mrf.mxu0
    %v412 = vadd.f32 %v77, %v411
    %413 = vmatmul.f32.gmra.mxu0 %v155
    %v414 = vpop.f32.mrf.mxu0
    %v415 = vadd.f32 %v82, %v414
    %416 = vmatmul.f32.gmra.mxu0 %v158
    %v417 = vpop.f32.mrf.mxu0
    %v418 = vadd.f32 %v87, %v417
    %419 = vmatmul.f32.gmra.mxu0 %v161
    %v420 = vpop.f32.mrf.mxu0
    %v421 = vadd.f32 %v92, %v420
    %422 = vmatmul.f32.gmra.mxu0 %v164
    %v423 = vpop.f32.mrf.mxu0
    %v424 = vadd.f32 %v97, %v423
    %425 = vmatmul.f32.gmra.mxu0 %v167
    %v426 = vpop.f32.mrf.mxu0
    %v427 = vadd.f32 %v102, %v426
    %428 = vmatmul.f32.gmra.mxu0 %v170
    %v429 = vpop.f32.mrf.mxu0
    %v430 = vadd.f32 %v107, %v429
    %431 = vmatmul.f32.gmra.mxu0 %v173
    %v432 = vpop.f32.mrf.mxu0
    %v433 = vadd.f32 %v112, %v432
    %434 = vmatmul.f32.gmra.mxu0 %v176
    %v435 = vpop.f32.mrf.mxu0
    %v436 = vadd.f32 %v117, %v435
    %437 = vmatmul.f32.gmra.mxu0 %v179
    %v438 = vpop.f32.mrf.mxu0
    %v439 = vadd.f32 %v122, %v438
    %440 = vmatmul.f32.gmra.mxu0 %v182
    %v441 = vpop.f32.mrf.mxu0
    %v442 = vadd.f32 %v127, %v441
    %443 = vmatmul.f32.gmra.mxu0 %v185
    %v444 = vpop.f32.mrf.mxu0
    %v445 = vadd.f32 %v132, %v444
    %446 = vmatmul.f32.gmra.mxu0 %v188
    %v447 = vpop.f32.mrf.mxu0
    %v448 = vadd.f32 %v137, %v447
    %449 = vmatmul.f32.gmra.mxu0 %v191
    %v450 = vpop.f32.mrf.mxu0
    %v451 = vadd.f32 %v142, %v450
    %452 = vdwg.mxu0
    %v453 = vmax.f32 %v211, 0.0
    %v454 = vmax.f32 %v276, 0.0
    %v455 = vmax.f32 %v341, 0.0
    %v456 = vmax.f32 %v406, 0.0
    %v457 = vmax.f32 %v214, 0.0
    %v458 = vmax.f32 %v279, 0.0
    %v459 = vmax.f32 %v344, 0.0
    %v460 = vmax.f32 %v409, 0.0
    %v461 = vmax.f32 %v217, 0.0
    %v462 = vmax.f32 %v282, 0.0
    %v463 = vmax.f32 %v347, 0.0
    %v464 = vmax.f32 %v412, 0.0
    %v465 = vmax.f32 %v220, 0.0
    %v466 = vmax.f32 %v285, 0.0
    %v467 = vmax.f32 %v350, 0.0
    %v468 = vmax.f32 %v415, 0.0
    %v469 = vmax.f32 %v223, 0.0
    %v470 = vmax.f32 %v288, 0.0
    %v471 = vmax.f32 %v353, 0.0
    %v472 = vmax.f32 %v418, 0.0
    %v473 = vmax.f32 %v226, 0.0
    %v474 = vmax.f32 %v291, 0.0
    %v475 = vmax.f32 %v356, 0.0
    %v476 = vmax.f32 %v421, 0.0
    %v477 = vmax.f32 %v229, 0.0
    %v478 = vmax.f32 %v294, 0.0
    %v479 = vmax.f32 %v359, 0.0
    %v480 = vmax.f32 %v424, 0.0
    %v481 = vmax.f32 %v232, 0.0
    %v482 = vmax.f32 %v297, 0.0
    %v483 = vmax.f32 %v362, 0.0
    %v484 = vmax.f32 %v427, 0.0
    %v485 = vmax.f32 %v235, 0.0
    %v486 = vmax.f32 %v300, 0.0
    %v487 = vmax.f32 %v365, 0.0
    %v488 = vmax.f32 %v430, 0.0
    %v489 = vmax.f32 %v238, 0.0
    %v490 = vmax.f32 %v303, 0.0
    %v491 = vmax.f32 %v368, 0.0
    %v492 = vmax.f32 %v433, 0.0
    %v493 = vmax.f32 %v241, 0.0
    %v494 = vmax.f32 %v306, 0.0
    %v495 = vmax.f32 %v371, 0.0
    %v496 = vmax.f32 %v436, 0.0
    %v497 = vmax.f32 %v244, 0.0
    %v498 = vmax.f32 %v309, 0.0
    %v499 = vmax.f32 %v374, 0.0
    %v500 = vmax.f32 %v439, 0.0
    %v501 = vmax.f32 %v247, 0.0
    %v502 = vmax.f32 %v312, 0.0
    %v503 = vmax.f32 %v377, 0.0
    %v504 = vmax.f32 %v442, 0.0
    %v505 = vmax.f32 %v250, 0.0
    %v506 = vmax.f32 %v315, 0.0
    %v507 = vmax.f32 %v380, 0.0
    %v508 = vmax.f32 %v445, 0.0
    %v509 = vmax.f32 %v253, 0.0
    %v510 = vmax.f32 %v318, 0.0
    %v511 = vmax.f32 %v383, 0.0
    %v512 = vmax.f32 %v448, 0.0
    %v513 = vmax.f32 %v256, 0.0
    %v514 = vmax.f32 %v321, 0.0
    %v515 = vmax.f32 %v386, 0.0
    %v516 = vmax.f32 %v451, 0.0
    %v517 = vld [vmem:[%s2] sm:$0xff]
    %v518 = vld [vmem:[%s2 + $0x8] sm:$0xff]
    %v519 = vld [vmem:[%s2 + $0x10] sm:$0xff]
    %v520 = vld [vmem:[%s2 + $0x18] sm:$0xff]
    %v521 = vld [vmem:[%s2 + $0x20] sm:$0xff]
    %v522 = vld [vmem:[%s2 + $0x28] sm:$0xff]
    %v523 = vld [vmem:[%s2 + $0x30] sm:$0xff]
    %v524 = vld [vmem:[%s2 + $0x38] sm:$0xff]
    %v525 = vld [vmem:[%s5 + $0x80] sm:$0xff]
    %v526 = vld [vmem:[%s5 + $0x88] sm:$0xff]
    %v527 = vld [vmem:[%s5 + $0x90] sm:$0xff]
    %v528 = vld [vmem:[%s5 + $0x98] sm:$0xff]
    %v529 = vld [vmem:[%s5 + $0xa0] sm:$0xff]
    %v530 = vld [vmem:[%s5 + $0xa8] sm:$0xff]
    %v531 = vld [vmem:[%s5 + $0xb0] sm:$0xff]
    %v532 = vld [vmem:[%s5 + $0xb8] sm:$0xff]
    %534 = vset.pattern.permute.xlu0 0
    %535 = vperm.xlu0 %534, %v525
    %v536 = vpop.permute.xlu0 %535
    %539 = vset.pattern.permute.xlu0 0
    %540 = vperm.xlu0 %539, %v526
    %v541 = vpop.permute.xlu0 %540
    %544 = vset.pattern.permute.xlu0 0
    %545 = vperm.xlu0 %544, %v527
    %v546 = vpop.permute.xlu0 %545
    %549 = vset.pattern.permute.xlu0 0
    %550 = vperm.xlu0 %549, %v528
    %v551 = vpop.permute.xlu0 %550
    %554 = vset.pattern.permute.xlu0 0
    %555 = vperm.xlu0 %554, %v529
    %v556 = vpop.permute.xlu0 %555
    %559 = vset.pattern.permute.xlu0 0
    %560 = vperm.xlu0 %559, %v530
    %v561 = vpop.permute.xlu0 %560
    %564 = vset.pattern.permute.xlu0 0
    %565 = vperm.xlu0 %564, %v531
    %v566 = vpop.permute.xlu0 %565
    %569 = vset.pattern.permute.xlu0 0
    %570 = vperm.xlu0 %569, %v532
    %v571 = vpop.permute.xlu0 %570
    %573 = vmatpush.msra.mxu0 %v513
    %574 = vmatpush.msra.mxu0 %v509
    %575 = vmatpush.msra.mxu0 %v505
    %576 = vmatpush.msra.mxu0 %v501
    %577 = vmatpush.msra.mxu0 %v497
    %578 = vmatpush.msra.mxu0 %v493
    %579 = vmatpush.msra.mxu0 %v489
    %580 = vmatpush.msra.mxu0 %v485
    %581 = vmatpush.msra.mxu0 %v481
    %582 = vmatpush.msra.mxu0 %v477
    %583 = vmatpush.msra.mxu0 %v473
    %584 = vmatpush.msra.mxu0 %v469
    %585 = vmatpush.msra.mxu0 %v465
    %586 = vmatpush.msra.mxu0 %v461
    %587 = vmatpush.msra.mxu0 %v457
    %588 = vmatpush.msra.mxu0 %v453
    %589 = vmatmul.f32.gmra.mxu0 %v517
    %v590 = vpop.f32.mrf.mxu0
    %v591 = vadd.f32 %v536, %v590
    %592 = vmatmul.f32.gmra.mxu0 %v518
    %v593 = vpop.f32.mrf.mxu0
    %v594 = vadd.f32 %v541, %v593
    %595 = vmatmul.f32.gmra.mxu0 %v519
    %v596 = vpop.f32.mrf.mxu0
    %v597 = vadd.f32 %v546, %v596
    %598 = vmatmul.f32.gmra.mxu0 %v520
    %v599 = vpop.f32.mrf.mxu0
    %v600 = vadd.f32 %v551, %v599
    %601 = vmatmul.f32.gmra.mxu0 %v521
    %v602 = vpop.f32.mrf.mxu0
    %v603 = vadd.f32 %v556, %v602
    %604 = vmatmul.f32.gmra.mxu0 %v522
    %v605 = vpop.f32.mrf.mxu0
    %v606 = vadd.f32 %v561, %v605
    %607 = vmatmul.f32.gmra.mxu0 %v523
    %v608 = vpop.f32.mrf.mxu0
    %v609 = vadd.f32 %v566, %v608
    %610 = vmatmul.f32.gmra.mxu0 %v524
    %v611 = vpop.f32.mrf.mxu0
    %v612 = vadd.f32 %v571, %v611
    %613 = vdwg.mxu0
    %614 = vmatpush.msra.mxu0 %v514
    %615 = vmatpush.msra.mxu0 %v510
    %616 = vmatpush.msra.mxu0 %v506
    %617 = vmatpush.msra.mxu0 %v502
    %618 = vmatpush.msra.mxu0 %v498
    %619 = vmatpush.msra.mxu0 %v494
    %620 = vmatpush.msra.mxu0 %v490
    %621 = vmatpush.msra.mxu0 %v486
    %622 = vmatpush.msra.mxu0 %v482
    %623 = vmatpush.msra.mxu0 %v478
    %624 = vmatpush.msra.mxu0 %v474
    %625 = vmatpush.msra.mxu0 %v470
    %626 = vmatpush.msra.mxu0 %v466
    %627 = vmatpush.msra.mxu0 %v462
    %628 = vmatpush.msra.mxu0 %v458
    %629 = vmatpush.msra.mxu0 %v454
    %630 = vmatmul.f32.gmra.mxu0 %v517
    %v631 = vpop.f32.mrf.mxu0
    %v632 = vadd.f32 %v536, %v631
    %633 = vmatmul.f32.gmra.mxu0 %v518
    %v634 = vpop.f32.mrf.mxu0
    %v635 = vadd.f32 %v541, %v634
    %636 = vmatmul.f32.gmra.mxu0 %v519
    %v637 = vpop.f32.mrf.mxu0
    %v638 = vadd.f32 %v546, %v637
    %639 = vmatmul.f32.gmra.mxu0 %v520
    %v640 = vpop.f32.mrf.mxu0
    %v641 = vadd.f32 %v551, %v640
    %642 = vmatmul.f32.gmra.mxu0 %v521
    %v643 = vpop.f32.mrf.mxu0
    %v644 = vadd.f32 %v556, %v643
    %645 = vmatmul.f32.gmra.mxu0 %v522
    %v646 = vpop.f32.mrf.mxu0
    %v647 = vadd.f32 %v561, %v646
    %648 = vmatmul.f32.gmra.mxu0 %v523
    %v649 = vpop.f32.mrf.mxu0
    %v650 = vadd.f32 %v566, %v649
    %651 = vmatmul.f32.gmra.mxu0 %v524
    %v652 = vpop.f32.mrf.mxu0
    %v653 = vadd.f32 %v571, %v652
    %654 = vdwg.mxu0
    %655 = vmatpush.msra.mxu0 %v515
    %656 = vmatpush.msra.mxu0 %v511
    %657 = vmatpush.msra.mxu0 %v507
    %658 = vmatpush.msra.mxu0 %v503
    %659 = vmatpush.msra.mxu0 %v499
    %660 = vmatpush.msra.mxu0 %v495
    %661 = vmatpush.msra.mxu0 %v491
    %662 = vmatpush.msra.mxu0 %v487
    %663 = vmatpush.msra.mxu0 %v483
    %664 = vmatpush.msra.mxu0 %v479
    %665 = vmatpush.msra.mxu0 %v475
    %666 = vmatpush.msra.mxu0 %v471
    %667 = vmatpush.msra.mxu0 %v467
    %668 = vmatpush.msra.mxu0 %v463
    %669 = vmatpush.msra.mxu0 %v459
    %670 = vmatpush.msra.mxu0 %v455
    %671 = vmatmul.f32.gmra.mxu0 %v517
    %v672 = vpop.f32.mrf.mxu0
    %v673 = vadd.f32 %v536, %v672
    %674 = vmatmul.f32.gmra.mxu0 %v518
    %v675 = vpop.f32.mrf.mxu0
    %v676 = vadd.f32 %v541, %v675
    %677 = vmatmul.f32.gmra.mxu0 %v519
    %v678 = vpop.f32.mrf.mxu0
    %v679 = vadd.f32 %v546, %v678
    %680 = vmatmul.f32.gmra.mxu0 %v520
    %v681 = vpop.f32.mrf.mxu0
    %v682 = vadd.f32 %v551, %v681
    %683 = vmatmul.f32.gmra.mxu0 %v521
    %v684 = vpop.f32.mrf.mxu0
    %v685 = vadd.f32 %v556, %v684
    %686 = vmatmul.f32.gmra.mxu0 %v522
    %v687 = vpop.f32.mrf.mxu0
    %v688 = vadd.f32 %v561, %v687
    %689 = vmatmul.f32.gmra.mxu0 %v523
    %v690 = vpop.f32.mrf.mxu0
    %v691 = vadd.f32 %v566, %v690
    %692 = vmatmul.f32.gmra.mxu0 %v524
    %v693 = vpop.f32.mrf.mxu0
    %v694 = vadd.f32 %v571, %v693
    %695 = vdwg.mxu0
    %696 = vmatpush.msra.mxu0 %v516
    %697 = vmatpush.msra.mxu0 %v512
    %698 = vmatpush.msra.mxu0 %v508
    %699 = vmatpush.msra.mxu0 %v504
    %700 = vmatpush.msra.mxu0 %v500
    %701 = vmatpush.msra.mxu0 %v496
    %702 = vmatpush.msra.mxu0 %v492
    %703 = vmatpush.msra.mxu0 %v488
    %704 = vmatpush.msra.mxu0 %v484
    %705 = vmatpush.msra.mxu0 %v480
    %706 = vmatpush.msra.mxu0 %v476
    %707 = vmatpush.msra.mxu0 %v472
    %708 = vmatpush.msra.mxu0 %v468
    %709 = vmatpush.msra.mxu0 %v464
    %710 = vmatpush.msra.mxu0 %v460
    %711 = vmatpush.msra.mxu0 %v456
    %712 = vmatmul.f32.gmra.mxu0 %v517
    %v713 = vpop.f32.mrf.mxu0
    %v714 = vadd.f32 %v536, %v713
    %715 = vmatmul.f32.gmra.mxu0 %v518
    %v716 = vpop.f32.mrf.mxu0
    %v717 = vadd.f32 %v541, %v716
    %718 = vmatmul.f32.gmra.mxu0 %v519
    %v719 = vpop.f32.mrf.mxu0
    %v720 = vadd.f32 %v546, %v719
    %721 = vmatmul.f32.gmra.mxu0 %v520
    %v722 = vpop.f32.mrf.mxu0
    %v723 = vadd.f32 %v551, %v722
    %724 = vmatmul.f32.gmra.mxu0 %v521
    %v725 = vpop.f32.mrf.mxu0
    %v726 = vadd.f32 %v556, %v725
    %727 = vmatmul.f32.gmra.mxu0 %v522
    %v728 = vpop.f32.mrf.mxu0
    %v729 = vadd.f32 %v561, %v728
    %730 = vmatmul.f32.gmra.mxu0 %v523
    %v731 = vpop.f32.mrf.mxu0
    %v732 = vadd.f32 %v566, %v731
    %733 = vmatmul.f32.gmra.mxu0 %v524
    %v734 = vpop.f32.mrf.mxu0
    %v735 = vadd.f32 %v571, %v734
    %736 = vdwg.mxu0
    %v737 = vmax.f32 %v591, 0.0
    %v738 = vmax.f32 %v632, 0.0
    %v739 = vmax.f32 %v673, 0.0
    %v740 = vmax.f32 %v714, 0.0
    %v741 = vmax.f32 %v594, 0.0
    %v742 = vmax.f32 %v635, 0.0
    %v743 = vmax.f32 %v676, 0.0
    %v744 = vmax.f32 %v717, 0.0
    %v745 = vmax.f32 %v597, 0.0
    %v746 = vmax.f32 %v638, 0.0
    %v747 = vmax.f32 %v679, 0.0
    %v748 = vmax.f32 %v720, 0.0
    %v749 = vmax.f32 %v600, 0.0
    %v750 = vmax.f32 %v641, 0.0
    %v751 = vmax.f32 %v682, 0.0
    %v752 = vmax.f32 %v723, 0.0
    %v753 = vmax.f32 %v603, 0.0
    %v754 = vmax.f32 %v644, 0.0
    %v755 = vmax.f32 %v685, 0.0
    %v756 = vmax.f32 %v726, 0.0
    %v757 = vmax.f32 %v606, 0.0
    %v758 = vmax.f32 %v647, 0.0
    %v759 = vmax.f32 %v688, 0.0
    %v760 = vmax.f32 %v729, 0.0
    %v761 = vmax.f32 %v609, 0.0
    %v762 = vmax.f32 %v650, 0.0
    %v763 = vmax.f32 %v691, 0.0
    %v764 = vmax.f32 %v732, 0.0
    %v765 = vmax.f32 %v612, 0.0
    %v766 = vmax.f32 %v653, 0.0
    %v767 = vmax.f32 %v694, 0.0
    %v768 = vmax.f32 %v735, 0.0
    %v769 = vld [vmem:[%s3] sm:$0xff]
    %v770 = vld [vmem:[%s3 + $0x8] sm:$0xff]
    %v771 = vld [vmem:[%s3 + $0x10] sm:$0xff]
    %v772 = vld [vmem:[%s3 + $0x18] sm:$0xff]
    %v773 = vld [vmem:[%s5 + $0xc0] sm:$0xff]
    %v774 = vld [vmem:[%s5 + $0xc8] sm:$0xff]
    %v775 = vld [vmem:[%s5 + $0xd0] sm:$0xff]
    %v776 = vld [vmem:[%s5 + $0xd8] sm:$0xff]
    %778 = vset.pattern.permute.xlu0 0
    %779 = vperm.xlu0 %778, %v773
    %v780 = vpop.permute.xlu0 %779
    %783 = vset.pattern.permute.xlu0 0
    %784 = vperm.xlu0 %783, %v774
    %v785 = vpop.permute.xlu0 %784
    %788 = vset.pattern.permute.xlu0 0
    %789 = vperm.xlu0 %788, %v775
    %v790 = vpop.permute.xlu0 %789
    %793 = vset.pattern.permute.xlu0 0
    %794 = vperm.xlu0 %793, %v776
    %v795 = vpop.permute.xlu0 %794
    %vm797 = vcmask 523264
    %v799 = vsel %vm797, %v769, 0
    %v802 = vsel %vm797, %v770, 0
    %v805 = vsel %vm797, %v771, 0
    %v808 = vsel %vm797, %v772, 0
    %810 = vmatpush.msra.mxu0 0.0
    %811 = vmatpush.msra.mxu0 0.0
    %812 = vmatpush.msra.mxu0 0.0
    %813 = vmatpush.msra.mxu0 0.0
    %814 = vmatpush.msra.mxu0 0.0
    %815 = vmatpush.msra.mxu0 0.0
    %816 = vmatpush.msra.mxu0 0.0
    %817 = vmatpush.msra.mxu0 0.0
    %818 = vmatpush.msra.mxu0 %v765
    %819 = vmatpush.msra.mxu0 %v761
    %820 = vmatpush.msra.mxu0 %v757
    %821 = vmatpush.msra.mxu0 %v753
    %822 = vmatpush.msra.mxu0 %v749
    %823 = vmatpush.msra.mxu0 %v745
    %824 = vmatpush.msra.mxu0 %v741
    %825 = vmatpush.msra.mxu0 %v737
    %826 = vmatmul.f32.gmra.mxu0 %v799
    %v827 = vpop.f32.mrf.mxu0
    %v828 = vadd.f32 %v780, %v827
    %829 = vmatmul.f32.gmra.mxu0 %v802
    %v830 = vpop.f32.mrf.mxu0
    %v831 = vadd.f32 %v785, %v830
    %832 = vmatmul.f32.gmra.mxu0 %v805
    %v833 = vpop.f32.mrf.mxu0
    %v834 = vadd.f32 %v790, %v833
    %835 = vmatmul.f32.gmra.mxu0 %v808
    %v836 = vpop.f32.mrf.mxu0
    %v837 = vadd.f32 %v795, %v836
    %838 = vdwg.mxu0
    %839 = vmatpush.msra.mxu0 0.0
    %840 = vmatpush.msra.mxu0 0.0
    %841 = vmatpush.msra.mxu0 0.0
    %842 = vmatpush.msra.mxu0 0.0
    %843 = vmatpush.msra.mxu0 0.0
    %844 = vmatpush.msra.mxu0 0.0
    %845 = vmatpush.msra.mxu0 0.0
    %846 = vmatpush.msra.mxu0 0.0
    %847 = vmatpush.msra.mxu0 %v766
    %848 = vmatpush.msra.mxu0 %v762
    %849 = vmatpush.msra.mxu0 %v758
    %850 = vmatpush.msra.mxu0 %v754
    %851 = vmatpush.msra.mxu0 %v750
    %852 = vmatpush.msra.mxu0 %v746
    %853 = vmatpush.msra.mxu0 %v742
    %854 = vmatpush.msra.mxu0 %v738
    %855 = vmatmul.f32.gmra.mxu0 %v799
    %v856 = vpop.f32.mrf.mxu0
    %v857 = vadd.f32 %v780, %v856
    %858 = vmatmul.f32.gmra.mxu0 %v802
    %v859 = vpop.f32.mrf.mxu0
    %v860 = vadd.f32 %v785, %v859
    %861 = vmatmul.f32.gmra.mxu0 %v805
    %v862 = vpop.f32.mrf.mxu0
    %v863 = vadd.f32 %v790, %v862
    %864 = vmatmul.f32.gmra.mxu0 %v808
    %v865 = vpop.f32.mrf.mxu0
    %v866 = vadd.f32 %v795, %v865
    %867 = vdwg.mxu0
    %868 = vmatpush.msra.mxu0 0.0
    %869 = vmatpush.msra.mxu0 0.0
    %870 = vmatpush.msra.mxu0 0.0
    %871 = vmatpush.msra.mxu0 0.0
    %872 = vmatpush.msra.mxu0 0.0
    %873 = vmatpush.msra.mxu0 0.0
    %874 = vmatpush.msra.mxu0 0.0
    %875 = vmatpush.msra.mxu0 0.0
    %876 = vmatpush.msra.mxu0 %v767
    %877 = vmatpush.msra.mxu0 %v763
    %878 = vmatpush.msra.mxu0 %v759
    %879 = vmatpush.msra.mxu0 %v755
    %880 = vmatpush.msra.mxu0 %v751
    %881 = vmatpush.msra.mxu0 %v747
    %882 = vmatpush.msra.mxu0 %v743
    %883 = vmatpush.msra.mxu0 %v739
    %884 = vmatmul.f32.gmra.mxu0 %v799
    %v885 = vpop.f32.mrf.mxu0
    %v886 = vadd.f32 %v780, %v885
    %887 = vmatmul.f32.gmra.mxu0 %v802
    %v888 = vpop.f32.mrf.mxu0
    %v889 = vadd.f32 %v785, %v888
    %890 = vmatmul.f32.gmra.mxu0 %v805
    %v891 = vpop.f32.mrf.mxu0
    %v892 = vadd.f32 %v790, %v891
    %893 = vmatmul.f32.gmra.mxu0 %v808
    %v894 = vpop.f32.mrf.mxu0
    %v895 = vadd.f32 %v795, %v894
    %896 = vdwg.mxu0
    %897 = vmatpush.msra.mxu0 0.0
    %898 = vmatpush.msra.mxu0 0.0
    %899 = vmatpush.msra.mxu0 0.0
    %900 = vmatpush.msra.mxu0 0.0
    %901 = vmatpush.msra.mxu0 0.0
    %902 = vmatpush.msra.mxu0 0.0
    %903 = vmatpush.msra.mxu0 0.0
    %904 = vmatpush.msra.mxu0 0.0
    %905 = vmatpush.msra.mxu0 %v768
    %906 = vmatpush.msra.mxu0 %v764
    %907 = vmatpush.msra.mxu0 %v760
    %908 = vmatpush.msra.mxu0 %v756
    %909 = vmatpush.msra.mxu0 %v752
    %910 = vmatpush.msra.mxu0 %v748
    %911 = vmatpush.msra.mxu0 %v744
    %912 = vmatpush.msra.mxu0 %v740
    %913 = vmatmul.f32.gmra.mxu0 %v799
    %v914 = vpop.f32.mrf.mxu0
    %v915 = vadd.f32 %v780, %v914
    %916 = vmatmul.f32.gmra.mxu0 %v802
    %v917 = vpop.f32.mrf.mxu0
    %v918 = vadd.f32 %v785, %v917
    %919 = vmatmul.f32.gmra.mxu0 %v805
    %v920 = vpop.f32.mrf.mxu0
    %v921 = vadd.f32 %v790, %v920
    %922 = vmatmul.f32.gmra.mxu0 %v808
    %v923 = vpop.f32.mrf.mxu0
    %v924 = vadd.f32 %v795, %v923
    %925 = vdwg.mxu0
    %v926 = vmax.f32 %v828, 0.0
    %v927 = vmax.f32 %v857, 0.0
    %v928 = vmax.f32 %v886, 0.0
    %v929 = vmax.f32 %v915, 0.0
    %v930 = vmax.f32 %v831, 0.0
    %v931 = vmax.f32 %v860, 0.0
    %v932 = vmax.f32 %v889, 0.0
    %v933 = vmax.f32 %v918, 0.0
    %v934 = vmax.f32 %v834, 0.0
    %v935 = vmax.f32 %v863, 0.0
    %v936 = vmax.f32 %v892, 0.0
    %v937 = vmax.f32 %v921, 0.0
    %v938 = vmax.f32 %v837, 0.0
    %v939 = vmax.f32 %v866, 0.0
    %v940 = vmax.f32 %v895, 0.0
    %v941 = vmax.f32 %v924, 0.0
    %v942 = vld [vmem:[%s4] sm:$0xff]
    %v943 = vld [vmem:[%s4 + $0x8] sm:$0xff]
    %v944 = vld [vmem:[%s5 + $0xe0] sm:$0xff]
    %v945 = vld [vmem:[%s5 + $0xe8] sm:$0xff]
    %947 = vset.pattern.permute.xlu0 0
    %948 = vperm.xlu0 %947, %v944
    %v949 = vpop.permute.xlu0 %948
    %952 = vset.pattern.permute.xlu0 0
    %953 = vperm.xlu0 %952, %v945
    %v954 = vpop.permute.xlu0 %953
    %vm956 = vcmask 261120
    %v958 = vsel %vm956, %v942, 0
    %v961 = vsel %vm956, %v943, 0
    %963 = vmatpush.msra.mxu0 0.0
    %964 = vmatpush.msra.mxu0 0.0
    %965 = vmatpush.msra.mxu0 0.0
    %966 = vmatpush.msra.mxu0 0.0
    %967 = vmatpush.msra.mxu0 0.0
    %968 = vmatpush.msra.mxu0 0.0
    %969 = vmatpush.msra.mxu0 0.0
    %970 = vmatpush.msra.mxu0 0.0
    %971 = vmatpush.msra.mxu0 0.0
    %972 = vmatpush.msra.mxu0 0.0
    %973 = vmatpush.msra.mxu0 0.0
    %974 = vmatpush.msra.mxu0 0.0
    %975 = vmatpush.msra.mxu0 %v938
    %976 = vmatpush.msra.mxu0 %v934
    %977 = vmatpush.msra.mxu0 %v930
    %978 = vmatpush.msra.mxu0 %v926
    %979 = vmatmul.f32.gmra.mxu0 %v958
    %v980 = vpop.f32.mrf.mxu0
    %v981 = vadd.f32 %v949, %v980
    %982 = vmatmul.f32.gmra.mxu0 %v961
    %v983 = vpop.f32.mrf.mxu0
    %v984 = vadd.f32 %v954, %v983
    %985 = vdwg.mxu0
    %986 = vmatpush.msra.mxu0 0.0
    %987 = vmatpush.msra.mxu0 0.0
    %988 = vmatpush.msra.mxu0 0.0
    %989 = vmatpush.msra.mxu0 0.0
    %990 = vmatpush.msra.mxu0 0.0
    %991 = vmatpush.msra.mxu0 0.0
    %992 = vmatpush.msra.mxu0 0.0
    %993 = vmatpush.msra.mxu0 0.0
    %994 = vmatpush.msra.mxu0 0.0
    %995 = vmatpush.msra.mxu0 0.0
    %996 = vmatpush.msra.mxu0 0.0
    %997 = vmatpush.msra.mxu0 0.0
    %998 = vmatpush.msra.mxu0 %v939
    %999 = vmatpush.msra.mxu0 %v935
    %1000 = vmatpush.msra.mxu0 %v931
    %1001 = vmatpush.msra.mxu0 %v927
    %1002 = vmatmul.f32.gmra.mxu0 %v958
    %v1003 = vpop.f32.mrf.mxu0
    %v1004 = vadd.f32 %v949, %v1003
    %1005 = vmatmul.f32.gmra.mxu0 %v961
    %v1006 = vpop.f32.mrf.mxu0
    %v1007 = vadd.f32 %v954, %v1006
    %1008 = vdwg.mxu0
    %1009 = vmatpush.msra.mxu0 0.0
    %1010 = vmatpush.msra.mxu0 0.0
    %1011 = vmatpush.msra.mxu0 0.0
    %1012 = vmatpush.msra.mxu0 0.0
    %1013 = vmatpush.msra.mxu0 0.0
    %1014 = vmatpush.msra.mxu0 0.0
    %1015 = vmatpush.msra.mxu0 0.0
    %1016 = vmatpush.msra.mxu0 0.0
    %1017 = vmatpush.msra.mxu0 0.0
    %1018 = vmatpush.msra.mxu0 0.0
    %1019 = vmatpush.msra.mxu0 0.0
    %1020 = vmatpush.msra.mxu0 0.0
    %1021 = vmatpush.msra.mxu0 %v940
    %1022 = vmatpush.msra.mxu0 %v936
    %1023 = vmatpush.msra.mxu0 %v932
    %1024 = vmatpush.msra.mxu0 %v928
    %1025 = vmatmul.f32.gmra.mxu0 %v958
    %v1026 = vpop.f32.mrf.mxu0
    %v1027 = vadd.f32 %v949, %v1026
    %1028 = vmatmul.f32.gmra.mxu0 %v961
    %v1029 = vpop.f32.mrf.mxu0
    %v1030 = vadd.f32 %v954, %v1029
    %1031 = vdwg.mxu0
    %1032 = vmatpush.msra.mxu0 0.0
    %1033 = vmatpush.msra.mxu0 0.0
    %1034 = vmatpush.msra.mxu0 0.0
    %1035 = vmatpush.msra.mxu0 0.0
    %1036 = vmatpush.msra.mxu0 0.0
    %1037 = vmatpush.msra.mxu0 0.0
    %1038 = vmatpush.msra.mxu0 0.0
    %1039 = vmatpush.msra.mxu0 0.0
    %1040 = vmatpush.msra.mxu0 0.0
    %1041 = vmatpush.msra.mxu0 0.0
    %1042 = vmatpush.msra.mxu0 0.0
    %1043 = vmatpush.msra.mxu0 0.0
    %1044 = vmatpush.msra.mxu0 %v941
    %1045 = vmatpush.msra.mxu0 %v937
    %1046 = vmatpush.msra.mxu0 %v933
    %1047 = vmatpush.msra.mxu0 %v929
    %1048 = vmatmul.f32.gmra.mxu0 %v958
    %v1049 = vpop.f32.mrf.mxu0
    %v1050 = vadd.f32 %v949, %v1049
    %1051 = vmatmul.f32.gmra.mxu0 %v961
    %v1052 = vpop.f32.mrf.mxu0
    %v1053 = vadd.f32 %v954, %v1052
    %1054 = vdwg.mxu0
    %v1055 = vxor.u32 %v984, 2147483648
    %v1056 = vxor.u32 %v1007, 2147483648
    %v1057 = vxor.u32 %v1030, 2147483648
    %v1058 = vxor.u32 %v1053, 2147483648
    %v1059 = vmul.f32 %v1055, 1.442695
    %v1060 = vpow.pop %v1059
    %v1061 = vmul.f32 %v1056, 1.442695
    %v1062 = vpow.pop %v1061
    %v1063 = vmul.f32 %v1057, 1.442695
    %v1064 = vpow.pop %v1063
    %v1065 = vmul.f32 %v1058, 1.442695
    %v1066 = vpow.pop %v1065
    %v1067 = vadd.f32 %v1060, 1.0
    %v1068 = vadd.f32 %v1062, 1.0
    %v1069 = vadd.f32 %v1064, 1.0
    %v1070 = vadd.f32 %v1066, 1.0
    %v1071 = vrcp.pop %v1067
    %v1072 = vmul.f32 %v1067, %v1071
    %v1073 = vsub.f32 1.0, %v1072
    %v1074 = vmul.f32 %v1071, %v1073
    %v1075 = vadd.f32 %v1071, %v1074
    %vm1076 = vweird.f32 %v1067
    %vm1077 = vweird.f32 %v1071
    %vm1078 = vmor %vm1076, %vm1077
    %v1079 = vsel %vm1078, %v1071, %v1075
    %v1080 = vand.u32 2147483647, %v1067
    %vm1081 = vcmp.eq.f32.partialorder %v1080, 8.507059e+37
    %v1082 = vand.u32 %v1067, 2147483648
    %v1083 = vor.u32 1.1754944e-38, %v1082
    %v1084 = vsel %vm1081, %v1083, %v1079
    %v1085 = vmul.f32 1.0, %v1084
    %v1086 = vrcp.pop %v1068
    %v1087 = vmul.f32 %v1068, %v1086
    %v1088 = vsub.f32 1.0, %v1087
    %v1089 = vmul.f32 %v1086, %v1088
    %v1090 = vadd.f32 %v1086, %v1089
    %vm1091 = vweird.f32 %v1068
    %vm1092 = vweird.f32 %v1086
    %vm1093 = vmor %vm1091, %vm1092
    %v1094 = vsel %vm1093, %v1086, %v1090
    %v1095 = vand.u32 2147483647, %v1068
    %vm1096 = vcmp.eq.f32.partialorder %v1095, 8.507059e+37
    %v1097 = vand.u32 %v1068, 2147483648
    %v1098 = vor.u32 1.1754944e-38, %v1097
    %v1099 = vsel %vm1096, %v1098, %v1094
    %v1100 = vmul.f32 1.0, %v1099
    %v1101 = vrcp.pop %v1069
    %v1102 = vmul.f32 %v1069, %v1101
    %v1103 = vsub.f32 1.0, %v1102
    %v1104 = vmul.f32 %v1101, %v1103
    %v1105 = vadd.f32 %v1101, %v1104
    %vm1106 = vweird.f32 %v1069
    %vm1107 = vweird.f32 %v1101
    %vm1108 = vmor %vm1106, %vm1107
    %v1109 = vsel %vm1108, %v1101, %v1105
    %v1110 = vand.u32 2147483647, %v1069
    %vm1111 = vcmp.eq.f32.partialorder %v1110, 8.507059e+37
    %v1112 = vand.u32 %v1069, 2147483648
    %v1113 = vor.u32 1.1754944e-38, %v1112
    %v1114 = vsel %vm1111, %v1113, %v1109
    %v1115 = vmul.f32 1.0, %v1114
    %v1116 = vrcp.pop %v1070
    %v1117 = vmul.f32 %v1070, %v1116
    %v1118 = vsub.f32 1.0, %v1117
    %v1119 = vmul.f32 %v1116, %v1118
    %v1120 = vadd.f32 %v1116, %v1119
    %vm1121 = vweird.f32 %v1070
    %vm1122 = vweird.f32 %v1116
    %vm1123 = vmor %vm1121, %vm1122
    %v1124 = vsel %vm1123, %v1116, %v1120
    %v1125 = vand.u32 2147483647, %v1070
    %vm1126 = vcmp.eq.f32.partialorder %v1125, 8.507059e+37
    %v1127 = vand.u32 %v1070, 2147483648
    %v1128 = vor.u32 1.1754944e-38, %v1127
    %v1129 = vsel %vm1126, %v1128, %v1124
    %v1130 = vmul.f32 1.0, %v1129
    %v1131 = vmul.f32 %v981, %v1085
    %v1132 = vmul.f32 %v1004, %v1100
    %v1133 = vmul.f32 %v1027, %v1115
    %v1134 = vmul.f32 %v1050, %v1130
    %v1139 = vrot.slane %v1132, 4
    %v1140 = vrot.slane %v1134, 4
    %vm1141 = vcmask 1043456
    %v1142 = vsel %vm1141, %v1131, %v1139
    %v1143 = vsel %vm1141, %v1133, %v1140
    %1146 = vst [vmem:[#allocation2] sm:$0xff] %v1142
    %1147 = vst [vmem:[#allocation2 + $0x8] sm:$0xff] %v1143
    // Predicated region
    $region26: #{tpu_custom_call.1} parent=1 // pred_check
      _
    $region27: #{tpu_custom_call.1} parent=1 // pred_check_branch
      %1149 = sbr.rel (0) target = $region29
    $region28: #{tpu_custom_call.1} parent=1 // pred_region
      %1151 = vsyncadd [#allocation3], 0
      %s1153 = sshll.u32 [#allocation2], 4
      %s1154 = int_to_ptr.vmem [resolvable:$true] %s1153
      %s1155 = sshll.u32 %s6, 4
      %s1156 = int_to_ptr.hbm [resolvable:$true] %s1155
      %1158 = dma.vmem_to_hbm [thread:$0]  %s1154, 256, %s1156, [#allocation3]
    $region29: #{tpu_custom_call.1} parent=1 // pred_fallthru
      _
    // Predicated region
    $region30: #{tpu_custom_call.1} parent=1 // pred_check
      _
    $region31: #{tpu_custom_call.1} parent=1 // pred_check_branch
      %1160 = sbr.rel (0) target = $region33
    $region32: #{tpu_custom_call.1} parent=1 // pred_region
      %1162 = dma.done [#allocation3], 256
    $region33: #{tpu_custom_call.1} parent=1 // pred_fallthru
      _
    %1163 = vsyncpa [#allocation3], 1

</llo_original>
